<compile_context>
chip_gen: v7x
topology: tpu7x:2x2x1
jax: 0.10.0
libtpu: 0.0.40
codegen_flags: <defaults>
</compile_context>

<pallas_src>
import numpy as np
import jax
import jax.numpy as jnp
from jax.experimental import pallas as pl
from jax.experimental.pallas import tpu as pltpu

# ---------------- static problem sizes (self-consistent) ----------------
B    = 1            # batch of x3; becomes the channel dim of the unbatched conv2d input
CO1  = 4            # ConvTranspose1d out_channels
C1   = 2 * CO1 - 1  # ConvTranspose1d in_channels (=7), must equal conv2d output height
K1   = 5            # ConvTranspose1d kernel, stride=1, padding=2 -> length preserved
PAD1 = 2
L    = 1            # spatial length of x3 (stride-2 conv2d => W_out == L only if L == 1)
OC2  = 3            # ConvTranspose2d out_channels
K2   = 3            # ConvTranspose2d kernel, stride=2, padding=1
PAD2 = 1
HO   = 2 * CO1 - 1  # conv2d output height (= C1 = 7)
WO   = 2 * L - 1    # conv2d output width  (= L = 1)

# epilogue broadcast (v2 + x3) is only valid under these invariants
assert B == 1 and L == 1 and HO == C1 and WO == L

PACK_SHAPE = (OC2, 8, 128)   # single packed VMEM input block
OUT_PAD    = (8, 128)        # lane-dense padded output tile


# ------- trace-time constant selection tensors (index structure of the convs) -------
def _sel1():
    # T1[o, t, k] = 1  iff  k == o + PAD1 - t  (ConvTranspose1d, stride=1)
    t = np.zeros((L, L, K1), np.float32)
    for o in range(L):
        for s in range(L):
            k = o + PAD1 - s
            if 0 <= k < K1:
                t[o, s, k] = 1.0
    return t


def _sel2(n_out, n_in):
    # T[o, i, k] = 1  iff  k == o - 2*i + PAD2  (ConvTranspose2d, stride=2)
    t = np.zeros((n_out, n_in, K2), np.float32)
    for o in range(n_out):
        for i in range(n_in):
            k = o - 2 * i + PAD2
            if 0 <= k < K2:
                t[o, i, k] = 1.0
    return t


_T1  = _sel1()           # (L, L, K1)
_T2H = _sel2(HO, CO1)    # (HO, CO1, K2)
_T2W = _sel2(WO, L)      # (WO, L, K2)


# ---------------- the single fused, grid-free Pallas kernel ----------------
def _fused_kernel(p_ref, o_ref):
    """conv_transpose1d -> conv_transpose2d -> (+x3) -> clamp[3,4] -> *0.2, fully fused.

    One packed (OC2, 8, 128) VMEM input, one (8, 128) lane-dense VMEM output.
    Contractions are VPU broadcast-multiply + reduce; v1 never leaves vregs.
    """
    p = p_ref[...]                                        # (3, 8, 128) f32, single load

    w2 = p[:, 0:CO1, 0:HO * WO]                           # (3, 4, 7) folded conv2 weight
    w1 = p[0, CO1:2 * CO1, 0:C1 * L]                      # (4, 7)    folded conv1 weight
    x3 = p[1, CO1:CO1 + 1, 0:C1 * L]                      # (1, 7)
    b2 = p[1, CO1 + 1:CO1 + 1 + OC2, 0:1]                 # (3, 1)
    b1 = p[2, CO1:2 * CO1, 0:1]                           # (4, 1)

    # ConvTranspose1d: lane-reduce matvec + bias
    v1 = jnp.sum(w1 * x3, axis=1, keepdims=True) + b1     # (4, 1)

    # ConvTranspose2d: broadcast-multiply + reduce over the input-channel axis
    v2 = jnp.sum(w2 * v1[None, :, :], axis=1) + b2        # (3, 7)

    # epilogue: + x3 (HO*WO == C1*L since L == 1), clamp[3,4], * (1/5)
    v6 = jnp.minimum(jnp.maximum(v2 + x3, 3.0), 4.0) * 0.2

    o_ref[...] = jnp.zeros_like(o_ref)
    o_ref[0:OC2, 0:HO * WO] = v6


# ---------------- forward pass ----------------
def forward(x1, x2, x3, x4, b2):
    f32 = jnp.float32
    x1, x2, x3, x4, b2 = (jnp.asarray(a, f32) for a in (x1, x2, x3, x4, b2))

    assert x1.shape == (C1, CO1, K1)
    assert x2.shape == (CO1,)
    assert x3.shape == (B, C1, L)
    assert x4.shape == (B, OC2, K2, K2)
    assert b2.shape == (OC2,)

    T1, T2H, T2W = jnp.asarray(_T1), jnp.asarray(_T2H), jnp.asarray(_T2W)

    # Fold the fixed transposed-conv index structure (flip / stride-insertion /
    # padding) into dense effective weights; tiny parameter-only ops that XLA can
    # fuse into / around the single custom call (allow_input_fusion).
    w1fold = jnp.einsum('iok,ptk->opit', x1, T1).reshape(CO1 * L, C1 * L)        # (4, 7)
    w2eff  = jnp.einsum('cab,hia,wjb->chwij', x4[0], T2H, T2W)                    # (3,7,1,4,1)
    w2fold = jnp.transpose(w2eff.reshape(OC2, HO * WO, CO1 * L), (0, 2, 1))       # (3, 4, 7)
    b1vec  = x2 if L == 1 else jnp.repeat(x2, L)                                  # (4,)
    x3row  = x3.reshape(C1 * L)                                                   # (7,)

    # Pack everything into ONE lane-aligned VMEM block: one DMA in, one DMA out.
    P = jnp.zeros(PACK_SHAPE, f32)
    P = P.at[:, 0:CO1, 0:HO * WO].set(w2fold)
    P = P.at[0, CO1:2 * CO1, 0:C1 * L].set(w1fold)
    P = P.at[1, CO1, 0:C1 * L].set(x3row)
    P = P.at[1, CO1 + 1:CO1 + 1 + OC2, 0].set(b2)
    P = P.at[2, CO1:2 * CO1, 0].set(b1vec)

    out_pad = pl.pallas_call(
        _fused_kernel,
        in_specs=[pl.BlockSpec(memory_space=pltpu.MemorySpace.VMEM)],
        out_specs=pl.BlockSpec(memory_space=pltpu.MemorySpace.VMEM),
        out_shape=jax.ShapeDtypeStruct(OUT_PAD, f32),
        compiler_params=pltpu.CompilerParams(allow_input_fusion=[True]),
        cost_estimate=pl.CostEstimate(
            flops=2 * (CO1 * C1 + OC2 * CO1 * HO * WO) + 4 * OC2 * HO * WO,
            transcendentals=0,
            bytes_accessed=int(4 * (np.prod(PACK_SHAPE) + np.prod(OUT_PAD))),
        ),
    )(P)

    return out_pad[0:OC2, 0:HO * WO].reshape(OC2, HO, WO)


# -------- pure-numpy reference (loop semantics of F.conv_transpose1d/2d) --------
def reference(x1, x2, x3, x4, b2):
    x1, x2, x3, x4, b2 = (np.asarray(a, np.float32) for a in (x1, x2, x3, x4, b2))
    v1 = np.zeros((B, CO1, L), np.float32)
    for n in range(B):
        for co in range(CO1):
            for o in range(L):
                s = x2[co]
                for ci in range(C1):
                    for k in range(K1):
                        t = o + PAD1 - k
                        if 0 <= t < L:
                            s += x3[n, ci, t] * x1[ci, co, k]
                v1[n, co, o] = s
    v2 = np.zeros((OC2, HO, WO), np.float32)
    for oc in range(OC2):
        v2[oc] += b2[oc]
        for ic in range(B):
            for ih in range(CO1):
                for iw in range(L):
                    for kh in range(K2):
                        for kw in range(K2):
                            oh = ih * 2 - PAD2 + kh
                            ow = iw * 2 - PAD2 + kw
                            if 0 <= oh < HO and 0 <= ow < WO:
                                v2[oc, oh, ow] += v1[ic, ih, iw] * x4[ic, oc, kh, kw]
    v3 = v2 + np.asarray(x3, np.float32)    # (OC2,HO,WO) + (1,C1,L) broadcast
    return np.clip(v3, 3.0, 4.0) / 5.0


if __name__ == "__main__":
    key = jax.random.PRNGKey(0)
    k1, k2, k3, k4, k5 = jax.random.split(key, 5)
    x1 = jax.random.normal(k1, (C1, CO1, K1), jnp.float32)     # ConvTranspose1d weight (in, out, k)
    x2 = jax.random.normal(k2, (CO1,), jnp.float32)            # ConvTranspose1d bias
    x3 = jax.random.normal(k3, (B, C1, L), jnp.float32)        # input (N, C, L)
    x4 = jax.random.normal(k4, (B, OC2, K2, K2), jnp.float32)  # ConvTranspose2d weight (in, out, kh, kw)
    b2 = jax.random.normal(k5, (OC2,), jnp.float32)            # ConvTranspose2d bias (from module init)

    out = jax.block_until_ready(jax.jit(forward)(x1, x2, x3, x4, b2))

    ref = reference(x1, x2, x3, x4, b2)
    if not np.allclose(np.asarray(out), ref, rtol=1e-4, atol=1e-4):
        raise AssertionError("Pallas output does not match reference")
    print("KERNEL_OK")
</pallas_src>

<mosaic_0001>
module attributes {stable_mosaic.version = 11 : i64} {
  func.func @_fused_kernel(%arg0: memref<3x8x128xf32, #tpu.memory_space<vmem>>, %arg1: memref<8x128xf32, #tpu.memory_space<vmem>>) attributes {dimension_semantics = [], scalar_prefetch = 0 : i64, scratch_operands = 0 : i64, tpu.core_type = #tpu.core_type<tc>} {
    %c0 = arith.constant 0 : index
    %c0_0 = arith.constant 0 : index
    %c0_1 = arith.constant 0 : index
    %0 = vector.load %arg0[%c0, %c0_0, %c0_1] : memref<3x8x128xf32, #tpu.memory_space<vmem>>, vector<3x8x128xf32>
    %1 = vector.extract_strided_slice %0 {offsets = [0, 0, 0], sizes = [3, 4, 7], strides = [1, 1, 1]} : vector<3x8x128xf32> to vector<3x4x7xf32>
    %2 = vector.extract_strided_slice %0 {offsets = [0, 4, 0], sizes = [1, 4, 7], strides = [1, 1, 1]} : vector<3x8x128xf32> to vector<1x4x7xf32>
    %3 = vector.shape_cast %2 : vector<1x4x7xf32> to vector<4x7xf32>
    %4 = vector.extract_strided_slice %0 {offsets = [1, 4, 0], sizes = [1, 1, 7], strides = [1, 1, 1]} : vector<3x8x128xf32> to vector<1x1x7xf32>
    %5 = vector.shape_cast %4 : vector<1x1x7xf32> to vector<1x7xf32>
    %6 = vector.extract_strided_slice %0 {offsets = [1, 5, 0], sizes = [1, 3, 1], strides = [1, 1, 1]} : vector<3x8x128xf32> to vector<1x3x1xf32>
    %7 = vector.shape_cast %6 : vector<1x3x1xf32> to vector<3x1xf32>
    %8 = vector.extract_strided_slice %0 {offsets = [2, 4, 0], sizes = [1, 4, 1], strides = [1, 1, 1]} : vector<3x8x128xf32> to vector<1x4x1xf32>
    %9 = vector.shape_cast %8 : vector<1x4x1xf32> to vector<4x1xf32>
    %10 = vector.broadcast %5 : vector<1x7xf32> to vector<4x7xf32>
    %11 = arith.mulf %3, %10 : vector<4x7xf32>
    %cst = arith.constant dense<0.000000e+00> : vector<4xf32>
    %12 = vector.multi_reduction <add>, %11, %cst [1] : vector<4x7xf32> to vector<4xf32>
    %13 = vector.shape_cast %12 : vector<4xf32> to vector<4x1xf32>
    %14 = arith.addf %13, %9 : vector<4x1xf32>
    %15 = vector.shape_cast %14 : vector<4x1xf32> to vector<1x4x1xf32>
    %16 = vector.broadcast %15 : vector<1x4x1xf32> to vector<3x4x7xf32>
    %17 = arith.mulf %1, %16 : vector<3x4x7xf32>
    %cst_2 = arith.constant dense<0.000000e+00> : vector<3x7xf32>
    %18 = vector.multi_reduction <add>, %17, %cst_2 [1] : vector<3x4x7xf32> to vector<3x7xf32>
    %19 = vector.broadcast %7 : vector<3x1xf32> to vector<3x7xf32>
    %20 = arith.addf %18, %19 : vector<3x7xf32>
    %21 = vector.broadcast %5 : vector<1x7xf32> to vector<3x7xf32>
    %22 = arith.addf %20, %21 : vector<3x7xf32>
    %cst_3 = arith.constant 3.000000e+00 : f32
    %23 = vector.broadcast %cst_3 : f32 to vector<3x7xf32>
    %24 = arith.maximumf %22, %23 : vector<3x7xf32>
    %cst_4 = arith.constant 4.000000e+00 : f32
    %25 = vector.broadcast %cst_4 : f32 to vector<3x7xf32>
    %26 = arith.minimumf %24, %25 : vector<3x7xf32>
    %cst_5 = arith.constant 2.000000e-01 : f32
    %27 = vector.broadcast %cst_5 : f32 to vector<3x7xf32>
    %28 = arith.mulf %26, %27 : vector<3x7xf32>
    %cst_6 = arith.constant 0.000000e+00 : f32
    %29 = vector.broadcast %cst_6 : f32 to vector<8x128xf32>
    %c0_7 = arith.constant 0 : index
    %c0_8 = arith.constant 0 : index
    %30 = vector.load %arg1[%c0_7, %c0_8] : memref<8x128xf32, #tpu.memory_space<vmem>>, vector<8x128xf32>
    tpu.vector_store %arg1[%c0_7, %c0_8], %29 {strides = array<i32>} : memref<8x128xf32, #tpu.memory_space<vmem>>, vector<8x128xf32>,
    %c0_9 = arith.constant 0 : index
    %c0_10 = arith.constant 0 : index
    %31 = vector.load %arg1[%c0_9, %c0_10] : memref<8x128xf32, #tpu.memory_space<vmem>>, vector<3x7xf32>
    tpu.vector_store %arg1[%c0_9, %c0_10], %28 {strides = array<i32>} : memref<8x128xf32, #tpu.memory_space<vmem>>, vector<3x7xf32>,
    return
  }
}

</mosaic_0001>

<llo_original>
// kernel: forward.1
$region0: #{forward.1}
  #allocation0 [shape = 'u32[]', space=smem, size = 0x4, offset = 0x4, fixed_abs, tag = 'smem constant byte address 0x4 - core index']
  #allocation1 [shape = 'u32[144,128]{1,0:T(1,128)}', space=vmem, size = 0x12000, scoped, tag = 'internal scratch']
  %s0 = inlined_call_operand.vmem [shape: f32[3,8,128], index: 0, kind: input, shape index: {}]
  %s1 = inlined_call_operand.vmem [shape: f32[8,128], index: 1, kind: output, shape index: {}]
  %s2 = sld [smem:[#allocation0]]
  $region14: #{forward.1} parent=0
    _
  %s4 = ssub.s32 1, %s2
  %s5 = scalar_select 0, %s4, %s2
  // Predicated region
  $region2: #{forward.1} parent=0 // pred_check
    _
  $region3: #{forward.1} parent=0 // pred_check_branch
    %7 = sbr.rel (0) target = $region5
  $region4: #{forward.1} parent=0 // pred_region
    _
  $region5: #{forward.1} parent=0 // pred_fallthru
    _
  %v8 = vld [vmem:[%s0] sm:$0xff]
  %v9 = vld [vmem:[%s0 + $0x8] sm:$0xff]
  %v10 = vld [vmem:[%s0 + $0x10] sm:$0xff]
  %v11 = vlaneseq
  %v12 = vshrl.u32 %v11, 7
  %v13 = vsub.s32 4, %v12
  %v14 = vrot.slane %v9, %v13
  %v15 = vmul.f32 %v8, %v14
  %vm16 = vcmask 56324
  %v17 = vsel %vm16, %v15, 0.0
  %18 = vadd.xlane.f32.xlu0 %v17
  %v19 = vpop.xlane.xlu0 %18
  %v20 = vadd.f32 %v19, %v10
  %22 = vset.pattern.permute.xlu0 0
  %23 = vperm.xlu0 %22, %v20
  %v24 = vpop.permute.xlu0 %23
  %v25 = vrot.slane %v24, 4
  %v27 = vmul.f32 %v8, %v25
  %v28 = vmul.f32 %v9, %v25
  %v29 = vmul.f32 %v10, %v25
  %vm30 = vcmask 52224
  %v31 = vsel %vm30, %v27, 0.0
  %v32 = vrot.slane %v31, 4
  %v33 = vadd.f32 %v31, %v32
  %v34 = vrot.slane %v33, 2
  %v35 = vadd.f32 %v33, %v34
  %v36 = vrot.slane %v35, 1
  %v37 = vadd.f32 %v35, %v36
  %v38 = vsel %vm30, %v28, 0.0
  %v39 = vrot.slane %v38, 4
  %v40 = vadd.f32 %v38, %v39
  %v41 = vrot.slane %v40, 2
  %v42 = vadd.f32 %v40, %v41
  %v43 = vrot.slane %v42, 1
  %v44 = vadd.f32 %v42, %v43
  %v45 = vsel %vm30, %v29, 0.0
  %v46 = vrot.slane %v45, 4
  %v47 = vadd.f32 %v45, %v46
  %v48 = vrot.slane %v47, 2
  %v49 = vadd.f32 %v47, %v48
  %v50 = vrot.slane %v49, 1
  %v51 = vadd.f32 %v49, %v50
  %53 = vset.pattern.permute.xlu0 0
  %54 = vperm.xlu0 %53, %v9
  %v55 = vpop.permute.xlu0 %54
  %v56 = vrot.slane %v55, 5
  %v57 = vrot.slane %v55, 6
  %v58 = vrot.slane %v55, 7
  %v62 = vadd.f32 %v37, %v56
  %v63 = vadd.f32 %v44, %v57
  %v64 = vadd.f32 %v51, %v58
  %v65 = vadd.f32 %v62, %v14
  %v66 = vadd.f32 %v63, %v14
  %v67 = vadd.f32 %v64, %v14
  %v68 = vmax.f32 %v65, 3.0
  %v69 = vmax.f32 %v66, 3.0
  %v70 = vmax.f32 %v67, 3.0
  %v71 = vmin.f32 %v68, 4.0
  %v72 = vmin.f32 %v69, 4.0
  %v73 = vmin.f32 %v70, 4.0
  %v74 = vmul.f32 %v71, 0.2
  %v75 = vmul.f32 %v72, 0.2
  %v76 = vmul.f32 %v73, 0.2
  %77 = vst [vmem:[%s1] sm:$0xff] 0.0
  %v81 = vrot.slane %v75, 7
  %vm82 = vcmask 1041409
  %v83 = vsel %vm82, %v81, %v74
  %v84 = vrot.slane %v76, 6
  %vm85 = vcmask 1042434
  %v86 = vsel %vm85, %v84, %v83
  %vm88 = vcmask 51200
  %89 = vst.msk [vmem:[%s1] sm:$0x7] %vm88, %v86
  // Predicated region
  $region6: #{forward.1} parent=0 // pred_check
    _
  $region7: #{forward.1} parent=0 // pred_check_branch
    %91 = sbr.rel (0) target = $region9
  $region8: #{forward.1} parent=0 // pred_region
    _
  $region9: #{forward.1} parent=0 // pred_fallthru
    _
  // Predicated region
  $region10: #{forward.1} parent=0 // pred_check
    _
  $region11: #{forward.1} parent=0 // pred_check_branch
    %93 = sbr.rel (0) target = $region13
  $region12: #{forward.1} parent=0 // pred_region
    _
  $region13: #{forward.1} parent=0 // pred_fallthru
    _

</llo_original>
